<compile_context>
chip_gen: v5e
topology: v5e:2x2
jax: 0.10.0
libtpu: 0.0.40
codegen_flags: <defaults>
</compile_context>

<pallas_src>
import jax
import jax.numpy as jnp
from jax.experimental import pallas as pl
from jax.experimental.pallas import tpu as pltpu


def inference_kernel(x_ref, w_ref, m_ref, o_ref):
    # x_ref: (TB, in_dim), w_ref: (in_dim, H), m_ref: (1, H), o_ref: (TB, H, H)
    # Hot path 1: small matmul on the MXU (f32 accumulation).
    value = jnp.dot(x_ref[...], w_ref[...],
                    preferred_element_type=jnp.float32)            # (TB, H)
    # Hot path 2: outer product -> one broadcasted multiply per output vreg.
    #   out[b, i, j] = value[b, i] * M[0, j]
    m_row = m_ref[...].reshape(1, 1, -1)                           # (1, 1, H)
    o_ref[...] = (value[:, :, None] * m_row).astype(o_ref.dtype)


def _choose_tb(B, in_dim, H, out_itemsize, vmem_budget_bytes=24 << 20):
    """Pick the largest batch tile whose double-buffered blocks fit VMEM."""
    # Double-buffered VMEM usage per grid step:
    #   out: 2 * tb*H*H*out_itemsize   (dominant term)
    #   x:   2 * tb*in_dim*4
    #   W:   2 * in_dim*H*4            (grid-invariant, budgeted anyway)
    #   M:   2 * (8*128)*4             (padded tile)
    fixed = 2 * in_dim * H * 4 + 2 * 8 * 128 * 4
    per_row = 2 * H * H * out_itemsize + 2 * in_dim * 4
    tb = max(8, (vmem_budget_bytes - fixed) // per_row)
    tb = min(tb, max(B, 8))
    if B > 8:
        # Keep at least 2 grid steps so v7x's two TensorCores both get work.
        half_b = ((B + 1) // 2 + 7) // 8 * 8
        tb = min(tb, max(8, half_b))
    # Multiple of 8: sublane alignment for the (tb, in_dim) x-block and the
    # (tb, H, H) output block's leading dim.
    tb = max(8, (tb // 8) * 8)
    return int(tb)


def inference_forward(x, W, M, *, tb=None, out_dtype=None):
    B, in_dim = x.shape
    in_dim_w, H = W.shape
    assert in_dim == in_dim_w, "x / W inner-dim mismatch"
    assert M.shape == (1, H), "M must be (1, interm_dim)"
    out_dtype = x.dtype if out_dtype is None else out_dtype

    if tb is None:
        tb = _choose_tb(B, in_dim, H, jnp.dtype(out_dtype).itemsize)

    # Pad the batch so B is a multiple of tb (padded rows are discarded below).
    grid = pl.cdiv(B, tb)
    Bp = grid * tb
    xp = x if Bp == B else jnp.pad(x, ((0, Bp - B), (0, 0)))

    out = pl.pallas_call(
        inference_kernel,
        out_shape=jax.ShapeDtypeStruct((Bp, H, H), out_dtype),
        grid_spec=pltpu.PrefetchScalarGridSpec(
            num_scalar_prefetch=0,
            grid=(grid,),
            in_specs=[
                pl.BlockSpec((tb, in_dim), lambda i: (i, 0)),   # x tile (batch-tiled)
                pl.BlockSpec((in_dim, H), lambda i: (0, 0)),    # full W, grid-invariant
                pl.BlockSpec((1, H), lambda i: (0, 0)),         # full M, grid-invariant
            ],
            out_specs=pl.BlockSpec((tb, H, H), lambda i: (i, 0, 0)),
        ),
        compiler_params=pltpu.CompilerParams(
            dimension_semantics=("parallel",),
            vmem_limit_bytes=32 << 20,  # within v7x scoped default; budget above stays under this
        ),
    )(xp, W, M)

    return out if Bp == B else out[:B]


def _reference(x, W, M):
    value = x @ W                                   # (B, H)
    return value[:, :, None] * M[None, :, :]        # (B, H, H)


if __name__ == "__main__":
    # Small, TPU-friendly shapes consistent with the module's forward.
    B, in_dim, interm_dim = 16, 32, 128

    key = jax.random.PRNGKey(0)
    kx, kw, km, kx2 = jax.random.split(key, 4)

    # Deterministic parameter init matching `2 * rand(...) - 1` (uniform [-1, 1)).
    W = jax.random.uniform(kw, (in_dim, interm_dim), jnp.float32,
                           minval=-1.0, maxval=1.0)
    M = jax.random.uniform(km, (1, interm_dim), jnp.float32,
                           minval=-1.0, maxval=1.0)
    x = jax.random.normal(kx, (B, in_dim), jnp.float32)

    out = inference_forward(x, W, M)
    out = jax.block_until_ready(out)

    ref = _reference(x, W, M)
    assert out.shape == (B, interm_dim, interm_dim)
    assert jnp.allclose(out, ref, atol=1e-5, rtol=1e-5), "mismatch vs reference"

    # Also exercise the non-divisible-batch path (padding + slice).
    B2 = 13
    x2 = jax.random.normal(kx2, (B2, in_dim), jnp.float32)
    out2 = jax.block_until_ready(inference_forward(x2, W, M))
    ref2 = _reference(x2, W, M)
    assert out2.shape == (B2, interm_dim, interm_dim)
    assert jnp.allclose(out2, ref2, atol=1e-5, rtol=1e-5), "mismatch (padded batch)"

    print("KERNEL_OK")
</pallas_src>

<mosaic_0001>
module attributes {stable_mosaic.version = 11 : i64} {
  func.func @inference_kernel(%arg0: i32, %arg1: memref<8x32xf32, #tpu.memory_space<vmem>>, %arg2: memref<32x128xf32, #tpu.memory_space<vmem>>, %arg3: memref<1x128xf32, #tpu.memory_space<vmem>>, %arg4: memref<8x128x128xf32, #tpu.memory_space<vmem>>) attributes {dimension_semantics = [#tpu.dimension_semantics<parallel>], iteration_bounds = array<i64: 2>, scalar_prefetch = 0 : i64, scratch_operands = 0 : i64, tpu.core_type = #tpu.core_type<tc>, window_params = [{transform_indices = @transform_0, window_bounds = array<i64: 8, 32>}, {pipeline_mode = #tpu.pipeline_mode<synchronous>, transform_indices = @transform_1, window_bounds = array<i64: 32, 128>}, {pipeline_mode = #tpu.pipeline_mode<synchronous>, transform_indices = @transform_2, window_bounds = array<i64: 1, 128>}, {transform_indices = @transform_3, window_bounds = array<i64: 8, 128, 128>}]} {
    %c0 = arith.constant 0 : index
    %c0_0 = arith.constant 0 : index
    %0 = vector.load %arg1[%c0, %c0_0] : memref<8x32xf32, #tpu.memory_space<vmem>>, vector<8x32xf32>
    %c0_1 = arith.constant 0 : index
    %c0_2 = arith.constant 0 : index
    %1 = vector.load %arg2[%c0_1, %c0_2] : memref<32x128xf32, #tpu.memory_space<vmem>>, vector<32x128xf32>
    %cst = arith.constant dense<0.000000e+00> : vector<8x128xf32>
    %2 = tpu.matmul %0, %1, %cst {dimension_numbers = #tpu.dot_dimension_numbers<[1], [0], [0], [1], [0, 0, 1, 1], [], []>} : vector<8x32xf32>, vector<32x128xf32>, vector<8x128xf32> -> vector<8x128xf32>
    %c0_3 = arith.constant 0 : index
    %c0_4 = arith.constant 0 : index
    %3 = vector.load %arg3[%c0_3, %c0_4] : memref<1x128xf32, #tpu.memory_space<vmem>>, vector<1x128xf32>
    %4 = vector.shape_cast %3 : vector<1x128xf32> to vector<1x1x128xf32>
    %5 = vector.shape_cast %2 : vector<8x128xf32> to vector<8x128x1xf32>
    %6 = vector.broadcast %5 : vector<8x128x1xf32> to vector<8x128x128xf32>
    %7 = vector.broadcast %4 : vector<1x1x128xf32> to vector<8x128x128xf32>
    %8 = arith.mulf %6, %7 : vector<8x128x128xf32>
    %c0_5 = arith.constant 0 : index
    %c0_6 = arith.constant 0 : index
    %c0_7 = arith.constant 0 : index
    %9 = vector.load %arg4[%c0_5, %c0_6, %c0_7] : memref<8x128x128xf32, #tpu.memory_space<vmem>>, vector<8x128x128xf32>
    tpu.vector_store %arg4[%c0_5, %c0_6, %c0_7], %8 {strides = array<i32>} : memref<8x128x128xf32, #tpu.memory_space<vmem>>, vector<8x128x128xf32>,
    return
  }
  func.func @transform_0(%arg0: i32) -> (i32, i32) {
    %c0_i32 = arith.constant 0 : i32
    %c0_i32_0 = arith.constant 0 : i32
    return %arg0, %c0_i32 : i32, i32
  }
  func.func @transform_1(%arg0: i32) -> (i32, i32) {
    %c0_i32 = arith.constant 0 : i32
    %c0_i32_0 = arith.constant 0 : i32
    %c0_i32_1 = arith.constant 0 : i32
    return %c0_i32, %c0_i32_0 : i32, i32
  }
  func.func @transform_2(%arg0: i32) -> (i32, i32) {
    %c0_i32 = arith.constant 0 : i32
    %c0_i32_0 = arith.constant 0 : i32
    %c0_i32_1 = arith.constant 0 : i32
    return %c0_i32, %c0_i32_0 : i32, i32
  }
  func.func @transform_3(%arg0: i32) -> (i32, i32, i32) {
    %c0_i32 = arith.constant 0 : i32
    %c0_i32_0 = arith.constant 0 : i32
    %c0_i32_1 = arith.constant 0 : i32
    return %arg0, %c0_i32, %c0_i32_0 : i32, i32, i32
  }
}

</mosaic_0001>

<llo_original>
// kernel: tpu_custom_call.1
$region0: #{tpu_custom_call.1}
  #allocation0 [shape = 'u32[]', space=smem, size = 0x4, offset = 0x4, fixed_abs, tag = 'smem constant byte address 0x4 - core index']
  #allocation1 [shape = 'u32[72,128]{1,0:T(1,128)}', space=vmem, size = 0x9000, scoped, tag = 'internal scratch']
  %s0 = inlined_call_operand.hbm [shape: f32[16,32], index: 0, kind: input, shape index: {}]
  %s1 = inlined_call_operand.hbm [shape: f32[32,128], index: 1, kind: input, shape index: {}]
  %s2 = inlined_call_operand.vmem [shape: f32[1,128], index: 2, kind: input, shape index: {}]
  %s3 = inlined_call_operand.hbm [shape: f32[16,128,128], index: 3, kind: output, shape index: {}]
  %s4 = sld [smem:[#allocation0]]
  $region53: #{tpu_custom_call.1} parent=0
    _
  %s6 = ssub.s32 1, %s4
  %s7 = scalar_select 0, %s6, %s4
  $region1: #{tpu_custom_call.1} parent=0
    #allocation2 [shape = 'u8[8192]{0}', space=vmem, size = 0x2000, scoped, tag = 'input window, operand 0']
    #allocation3 [shape = 's32[2]{0}', space=sflag, size = 0x8, scoped, tag = 'scoped memory for tpu_custom_call.1']
    #allocation4 [shape = 's32[2]{0}', space=sflag, size = 0x8, scoped, tag = 'scoped memory for tpu_custom_call.1']
    #allocation5 [shape = 'u8[16384]{0}', space=vmem, size = 0x4000, scoped, tag = 'input window, operand 1, single buffered']
    #allocation6 [shape = 's32[1]{0}', space=sflag, size = 0x4, scoped, tag = 'scoped memory for tpu_custom_call.1']
    #allocation7 [shape = 'u8[1048576]{0}', space=vmem, size = 0x100000, scoped, tag = 'output window, operand 0']
    %8 = vsyncpa [#allocation3], 0
    %s9 = scalar_lea.sflag [#allocation3], 1
    %10 = vsyncpa %s9, 0
    %11 = vsyncpa [#allocation6], 0
    %12 = vsyncpa [#allocation4], 0
    %s13 = scalar_lea.sflag [#allocation4], 1
    %14 = vsyncpa %s13, 0
    loop: start=0, step=1, limit=4
    $region2: #{tpu_custom_call.1} parent=1 // loop_pre_header
      _
    $region3: #{tpu_custom_call.1} parent=1 // loop_header
      %s16 = sphi 0, %s20
      %p17 = scmp.ge.s32.totalorder %s16, 4
      %s26 = sphi 0, %s28
      %s29 = sphi 0, %s26
      %s30 = sphi 0, %s29
      %s46 = sphi 0, %s30
      %s50 = sphi 0, %s50
      %s52 = sphi 0, %s50
      %s53 = sphi 0, %s52
      %s67 = sphi 0, %s53
      %s71 = sphi 0, %s71
      %s73 = sphi 0, %s71
      %s74 = sphi 0, %s73
      %s88 = sphi 0, %s74
      %s94 = sphi 0, %s96
      %s97 = sphi 0, %s94
      %s98 = sphi 0, %s97
      %s114 = sphi 0, %s98
    $region4: #{tpu_custom_call.1} parent=1 // loop_header_branch
      %19 = sbr.rel (%p17) target = $region8
    $region5: #{tpu_custom_call.1} parent=1 // loop_body
      %s21 = ssub.s32 %s16, 1
      %s22 = ssub.s32 %s16, 2
      %s23 = sadd.s32 %s16, 1
      %s24 = ssub.s32 %s16, %s23
      %p25 = scmp.eq.s32.totalorder %s24, 0
      %s27 = sadd.s32 %s26, 1
      %s28 = scalar_select %p25, %s26, %s27
      %p31 = pneg %p25
      %p32 = scmp.eq.s32.totalorder %s16, 1
      %p33 = por %p31, %p32
      %p34 = scmp.ne.s32.totalorder %s26, %s29
      %p35 = scmp.eq.s32.totalorder %s16, 0
      %p36 = por %p34, %p35
      %p37 = scmp.ne.s32.totalorder %s26, %s29
      %p38 = scmp.eq.s32.totalorder %s21, 1
      %p39 = por %p37, %p38
      %p40 = scmp.ne.s32.totalorder %s29, %s30
      %p41 = scmp.eq.s32.totalorder %s21, 0
      %p42 = por %p40, %p41
      %p43 = scmp.ne.s32.totalorder %s29, %s30
      %p44 = scmp.eq.s32.totalorder %s22, 1
      %p45 = por %p43, %p44
      %p47 = scmp.ne.s32.totalorder %s30, %s46
      %p48 = scmp.eq.s32.totalorder %s22, 0
      %p49 = por %p47, %p48
      %s51 = sadd.s32 %s50, 1
      %p54 = scmp.eq.s32.totalorder %s16, 1
      %p55 = scmp.ne.s32.totalorder %s50, %s52
      %p56 = scmp.eq.s32.totalorder %s16, 0
      %p57 = por %p55, %p56
      %p58 = scmp.ne.s32.totalorder %s50, %s52
      %p59 = scmp.eq.s32.totalorder %s21, 1
      %p60 = por %p58, %p59
      %p61 = scmp.ne.s32.totalorder %s52, %s53
      %p62 = scmp.eq.s32.totalorder %s21, 0
      %p63 = por %p61, %p62
      %p64 = scmp.ne.s32.totalorder %s52, %s53
      %p65 = scmp.eq.s32.totalorder %s22, 1
      %p66 = por %p64, %p65
      %p68 = scmp.ne.s32.totalorder %s53, %s67
      %p69 = scmp.eq.s32.totalorder %s22, 0
      %p70 = por %p68, %p69
      %s72 = sadd.s32 %s71, 1
      %p75 = scmp.eq.s32.totalorder %s16, 1
      %p76 = scmp.ne.s32.totalorder %s71, %s73
      %p77 = scmp.eq.s32.totalorder %s16, 0
      %p78 = por %p76, %p77
      %p79 = scmp.ne.s32.totalorder %s71, %s73
      %p80 = scmp.eq.s32.totalorder %s21, 1
      %p81 = por %p79, %p80
      %p82 = scmp.ne.s32.totalorder %s73, %s74
      %p83 = scmp.eq.s32.totalorder %s21, 0
      %p84 = por %p82, %p83
      %p85 = scmp.ne.s32.totalorder %s73, %s74
      %p86 = scmp.eq.s32.totalorder %s22, 1
      %p87 = por %p85, %p86
      %p89 = scmp.ne.s32.totalorder %s74, %s88
      %p90 = scmp.eq.s32.totalorder %s22, 0
      %p91 = por %p89, %p90
      %s92 = ssub.s32 %s16, %s23
      %p93 = scmp.eq.s32.totalorder %s92, 0
      %s95 = sadd.s32 %s94, 1
      %s96 = scalar_select %p93, %s94, %s95
      %p99 = pneg %p93
      %p100 = scmp.eq.s32.totalorder %s16, 1
      %p101 = por %p99, %p100
      %p102 = scmp.ne.s32.totalorder %s94, %s97
      %p103 = scmp.eq.s32.totalorder %s16, 0
      %p104 = por %p102, %p103
      %p105 = scmp.ne.s32.totalorder %s94, %s97
      %p106 = scmp.eq.s32.totalorder %s21, 1
      %p107 = por %p105, %p106
      %p108 = scmp.ne.s32.totalorder %s97, %s98
      %p109 = scmp.eq.s32.totalorder %s21, 0
      %p110 = por %p108, %p109
      %p111 = scmp.ne.s32.totalorder %s97, %s98
      %p112 = scmp.eq.s32.totalorder %s22, 1
      %p113 = por %p111, %p112
      %p115 = scmp.ne.s32.totalorder %s98, %s114
      %p116 = scmp.eq.s32.totalorder %s22, 0
      %p117 = por %p115, %p116
      %p118 = scmp.le.s32.totalorder 1, %s16
      %p119 = scmp.lt.s32.totalorder %s16, 3
      %p120 = pnand %p118, %p119
      %p121 = pneg %p120
      // Predicated region
      $region9: #{tpu_custom_call.1} parent=5 // pred_check
        _
      $region10: #{tpu_custom_call.1} parent=5 // pred_check_branch
        %123 = sbr.rel (%p120) target = $region12
      $region11: #{tpu_custom_call.1} parent=5 // pred_region
        %s124 = ssub.s32 %s16, 1
        // Predicated region
        $region13: #{tpu_custom_call.1} parent=11 // pred_check
          %p125 = pneg %p63
        $region14: #{tpu_custom_call.1} parent=11 // pred_check_branch
          %127 = sbr.rel (%p125) target = $region16
        $region15: #{tpu_custom_call.1} parent=11 // pred_region
          %129 = vsyncadd [#allocation6], 0
          %s130 = sshll.u32 %s1, 4
          %s131 = int_to_ptr.hbm [resolvable:$true] %s130
          %s132 = sshll.u32 [#allocation5], 4
          %s133 = int_to_ptr.vmem [resolvable:$true] %s132
          %138 = dma.hbm_to_vmem [thread:$0]  %s131, 512, %s133, [#allocation6], 128, 128, 8
        $region16: #{tpu_custom_call.1} parent=11 // pred_fallthru
          _
        // Predicated region
        $region17: #{tpu_custom_call.1} parent=11 // pred_check
          %p139 = pneg %p84
        $region18: #{tpu_custom_call.1} parent=11 // pred_check_branch
          %141 = sbr.rel (%p139) target = $region20
        $region19: #{tpu_custom_call.1} parent=11 // pred_region
          _
        $region20: #{tpu_custom_call.1} parent=11 // pred_fallthru
          _
      $region12: #{tpu_custom_call.1} parent=5 // pred_fallthru
        _
      %p142 = scmp.lt.s32.totalorder %s16, 2
      // Predicated region
      $region21: #{tpu_custom_call.1} parent=5 // pred_check
        %p143 = pneg %p142
      $region22: #{tpu_custom_call.1} parent=5 // pred_check_branch
        %145 = sbr.rel (%p143) target = $region24
      $region23: #{tpu_custom_call.1} parent=5 // pred_region
        // Predicated region
        $region25: #{tpu_custom_call.1} parent=23 // pred_check
          %p146 = pneg %p36
        $region26: #{tpu_custom_call.1} parent=23 // pred_check_branch
          %148 = sbr.rel (%p146) target = $region28
        $region27: #{tpu_custom_call.1} parent=23 // pred_region
          %s149 = sand.u32 %s26, 1
          %s150 = scalar_lea.sflag [#allocation3], %s149
          %s151 = sand.u32 %s26, 1
          %s152 = smul.addr %s151, 8
          %s153 = scalar_lea.vmem [#allocation2], %s152
          %155 = vsyncadd %s150, 0
          %s156 = smul.addr %s16, 8
          %s157 = scalar_lea.hbm %s0, %s156
          %s159 = sshll.u32 %s157, 4
          %s160 = int_to_ptr.hbm [resolvable:$true] %s159
          %s161 = sshll.u32 %s153, 4
          %s162 = int_to_ptr.vmem [resolvable:$true] %s161
          %164 = dma.hbm_to_vmem [thread:$0]  %s160, 128, %s162, %s150
        $region28: #{tpu_custom_call.1} parent=23 // pred_fallthru
          _
      $region24: #{tpu_custom_call.1} parent=5 // pred_fallthru
        _
      %p165 = scmp.le.s32.totalorder 1, %s16
      %p166 = scmp.lt.s32.totalorder %s16, 3
      %p167 = pnand %p165, %p166
      %p168 = pneg %p167
      // Predicated region
      $region29: #{tpu_custom_call.1} parent=5 // pred_check
        _
      $region30: #{tpu_custom_call.1} parent=5 // pred_check_branch
        %170 = sbr.rel (%p167) target = $region32
      $region31: #{tpu_custom_call.1} parent=5 // pred_region
        %s171 = ssub.s32 %s16, 1
        %s172 = sand.u32 %s29, 1
        %s173 = scalar_lea.sflag [#allocation3], %s172
        %s174 = sand.u32 %s29, 1
        %s175 = smul.addr %s174, 8
        %s176 = scalar_lea.vmem [#allocation2], %s175
        // Predicated region
        $region33: #{tpu_custom_call.1} parent=31 // pred_check
          %p177 = pneg %p42
        $region34: #{tpu_custom_call.1} parent=31 // pred_check_branch
          %179 = sbr.rel (%p177) target = $region36
        $region35: #{tpu_custom_call.1} parent=31 // pred_region
          %181 = dma.done %s173, 128
        $region36: #{tpu_custom_call.1} parent=31 // pred_fallthru
          _
        // Predicated region
        $region37: #{tpu_custom_call.1} parent=31 // pred_check
          %p182 = pneg %p63
        $region38: #{tpu_custom_call.1} parent=31 // pred_check_branch
          %184 = sbr.rel (%p182) target = $region40
        $region39: #{tpu_custom_call.1} parent=31 // pred_region
          %186 = dma.done [#allocation6], 512
        $region40: #{tpu_custom_call.1} parent=31 // pred_fallthru
          _
        %s187 = sand.u32 %s29, 1
        %s188 = scalar_lea.sflag [#allocation3], %s187
        %s189 = sand.u32 %s29, 1
        %s190 = smul.addr %s189, 8
        %s191 = scalar_lea.vmem [#allocation2], %s190
        %p192 = pneg %p42
        %p193 = pneg %p39
        %p194 = pneg %p63
        %p195 = pneg %p60
        %p196 = pneg %p84
        %p197 = pneg %p81
        %p198 = pneg %p110
        %p199 = pneg %p107
        %s200 = sand.u32 %s97, 1
        %s201 = scalar_lea.sflag [#allocation4], %s200
        %s202 = sand.u32 %s97, 1
        %s203 = smul.addr %s202, 1024
        %s204 = scalar_lea.vmem [#allocation7], %s203
        %s205 = smul.u32 8, %s21
        %v206 = vld [vmem:[%s176] sm:$0xff]
        %v207 = vld [vmem:[#allocation5] sm:$0xff]
        %v208 = vld [vmem:[#allocation5 + $0x8] sm:$0xff]
        %v209 = vld [vmem:[#allocation5 + $0x10] sm:$0xff]
        %v210 = vld [vmem:[#allocation5 + $0x18] sm:$0xff]
        %vm211 = vcmask 261120
        %v213 = vsel %vm211, %v206, 0
        %215 = vmatpush.msra.mxu0 0.0
        %216 = vmatpush.msra.mxu0 0.0
        %217 = vmatpush.msra.mxu0 0.0
        %218 = vmatpush.msra.mxu0 0.0
        %219 = vmatpush.msra.mxu0 0.0
        %220 = vmatpush.msra.mxu0 0.0
        %221 = vmatpush.msra.mxu0 0.0
        %222 = vmatpush.msra.mxu0 0.0
        %223 = vmatpush.msra.mxu0 0.0
        %224 = vmatpush.msra.mxu0 0.0
        %225 = vmatpush.msra.mxu0 0.0
        %226 = vmatpush.msra.mxu0 0.0
        %227 = vmatpush.msra.mxu0 %v210
        %228 = vmatpush.msra.mxu0 %v209
        %229 = vmatpush.msra.mxu0 %v208
        %230 = vmatpush.msra.mxu0 %v207
        %231 = vmatmul.f32.gmra.mxu0 %v213
        %v232 = vpop.f32.mrf.mxu0
        %v233 = vadd.f32 0.0, %v232
        %234 = vdwg.mxu0
        %v235 = vld [vmem:[%s2] sm:$0x1]
        %v236 = vperm.slane %v233, 0
        %v237 = vlaneseq
        %v238 = vshrl.u32 %v237, 7
        %240 = vset.pattern.permute.xlu0 %v238
        %241 = vperm.xlu0 %240, %v236
        %v242 = vpop.permute.xlu0 %241
        %v243 = vlaneseq
        %v244 = vshrl.u32 %v243, 7
        %v245 = vadd.s32 %v244, 8
        %246 = vset.pattern.permute.xlu0 %v245
        %247 = vperm.xlu0 %246, %v236
        %v248 = vpop.permute.xlu0 %247
        %v249 = vlaneseq
        %v250 = vshrl.u32 %v249, 7
        %v251 = vadd.s32 %v250, 16
        %252 = vset.pattern.permute.xlu0 %v251
        %253 = vperm.xlu0 %252, %v236
        %v254 = vpop.permute.xlu0 %253
        %v255 = vlaneseq
        %v256 = vshrl.u32 %v255, 7
        %v257 = vadd.s32 %v256, 24
        %258 = vset.pattern.permute.xlu0 %v257
        %259 = vperm.xlu0 %258, %v236
        %v260 = vpop.permute.xlu0 %259
        %v261 = vlaneseq
        %v262 = vshrl.u32 %v261, 7
        %v263 = vadd.s32 %v262, 32
        %264 = vset.pattern.permute.xlu0 %v263
        %265 = vperm.xlu0 %264, %v236
        %v266 = vpop.permute.xlu0 %265
        %v267 = vlaneseq
        %v268 = vshrl.u32 %v267, 7
        %v269 = vadd.s32 %v268, 40
        %270 = vset.pattern.permute.xlu0 %v269
        %271 = vperm.xlu0 %270, %v236
        %v272 = vpop.permute.xlu0 %271
        %v273 = vlaneseq
        %v274 = vshrl.u32 %v273, 7
        %v275 = vadd.s32 %v274, 48
        %276 = vset.pattern.permute.xlu0 %v275
        %277 = vperm.xlu0 %276, %v236
        %v278 = vpop.permute.xlu0 %277
        %v279 = vlaneseq
        %v280 = vshrl.u32 %v279, 7
        %v281 = vadd.s32 %v280, 56
        %282 = vset.pattern.permute.xlu0 %v281
        %283 = vperm.xlu0 %282, %v236
        %v284 = vpop.permute.xlu0 %283
        %v285 = vlaneseq
        %v286 = vshrl.u32 %v285, 7
        %v287 = vadd.s32 %v286, 64
        %288 = vset.pattern.permute.xlu0 %v287
        %289 = vperm.xlu0 %288, %v236
        %v290 = vpop.permute.xlu0 %289
        %v291 = vlaneseq
        %v292 = vshrl.u32 %v291, 7
        %v293 = vadd.s32 %v292, 72
        %294 = vset.pattern.permute.xlu0 %v293
        %295 = vperm.xlu0 %294, %v236
        %v296 = vpop.permute.xlu0 %295
        %v297 = vlaneseq
        %v298 = vshrl.u32 %v297, 7
        %v299 = vadd.s32 %v298, 80
        %300 = vset.pattern.permute.xlu0 %v299
        %301 = vperm.xlu0 %300, %v236
        %v302 = vpop.permute.xlu0 %301
        %v303 = vlaneseq
        %v304 = vshrl.u32 %v303, 7
        %v305 = vadd.s32 %v304, 88
        %306 = vset.pattern.permute.xlu0 %v305
        %307 = vperm.xlu0 %306, %v236
        %v308 = vpop.permute.xlu0 %307
        %v309 = vlaneseq
        %v310 = vshrl.u32 %v309, 7
        %v311 = vadd.s32 %v310, 96
        %312 = vset.pattern.permute.xlu0 %v311
        %313 = vperm.xlu0 %312, %v236
        %v314 = vpop.permute.xlu0 %313
        %v315 = vlaneseq
        %v316 = vshrl.u32 %v315, 7
        %v317 = vadd.s32 %v316, 104
        %318 = vset.pattern.permute.xlu0 %v317
        %319 = vperm.xlu0 %318, %v236
        %v320 = vpop.permute.xlu0 %319
        %v321 = vlaneseq
        %v322 = vshrl.u32 %v321, 7
        %v323 = vadd.s32 %v322, 112
        %324 = vset.pattern.permute.xlu0 %v323
        %325 = vperm.xlu0 %324, %v236
        %v326 = vpop.permute.xlu0 %325
        %v327 = vlaneseq
        %v328 = vshrl.u32 %v327, 7
        %v329 = vadd.s32 %v328, 120
        %330 = vset.pattern.permute.xlu0 %v329
        %331 = vperm.xlu0 %330, %v236
        %v332 = vpop.permute.xlu0 %331
        %v333 = vperm.slane %v233, 1
        %v334 = vlaneseq
        %v335 = vshrl.u32 %v334, 7
        %337 = vset.pattern.permute.xlu0 %v335
        %338 = vperm.xlu0 %337, %v333
        %v339 = vpop.permute.xlu0 %338
        %v340 = vlaneseq
        %v341 = vshrl.u32 %v340, 7
        %v342 = vadd.s32 %v341, 8
        %343 = vset.pattern.permute.xlu0 %v342
        %344 = vperm.xlu0 %343, %v333
        %v345 = vpop.permute.xlu0 %344
        %v346 = vlaneseq
        %v347 = vshrl.u32 %v346, 7
        %v348 = vadd.s32 %v347, 16
        %349 = vset.pattern.permute.xlu0 %v348
        %350 = vperm.xlu0 %349, %v333
        %v351 = vpop.permute.xlu0 %350
        %v352 = vlaneseq
        %v353 = vshrl.u32 %v352, 7
        %v354 = vadd.s32 %v353, 24
        %355 = vset.pattern.permute.xlu0 %v354
        %356 = vperm.xlu0 %355, %v333
        %v357 = vpop.permute.xlu0 %356
        %v358 = vlaneseq
        %v359 = vshrl.u32 %v358, 7
        %v360 = vadd.s32 %v359, 32
        %361 = vset.pattern.permute.xlu0 %v360
        %362 = vperm.xlu0 %361, %v333
        %v363 = vpop.permute.xlu0 %362
        %v364 = vlaneseq
        %v365 = vshrl.u32 %v364, 7
        %v366 = vadd.s32 %v365, 40
        %367 = vset.pattern.permute.xlu0 %v366
        %368 = vperm.xlu0 %367, %v333
        %v369 = vpop.permute.xlu0 %368
        %v370 = vlaneseq
        %v371 = vshrl.u32 %v370, 7
        %v372 = vadd.s32 %v371, 48
        %373 = vset.pattern.permute.xlu0 %v372
        %374 = vperm.xlu0 %373, %v333
        %v375 = vpop.permute.xlu0 %374
        %v376 = vlaneseq
        %v377 = vshrl.u32 %v376, 7
        %v378 = vadd.s32 %v377, 56
        %379 = vset.pattern.permute.xlu0 %v378
        %380 = vperm.xlu0 %379, %v333
        %v381 = vpop.permute.xlu0 %380
        %v382 = vlaneseq
        %v383 = vshrl.u32 %v382, 7
        %v384 = vadd.s32 %v383, 64
        %385 = vset.pattern.permute.xlu0 %v384
        %386 = vperm.xlu0 %385, %v333
        %v387 = vpop.permute.xlu0 %386
        %v388 = vlaneseq
        %v389 = vshrl.u32 %v388, 7
        %v390 = vadd.s32 %v389, 72
        %391 = vset.pattern.permute.xlu0 %v390
        %392 = vperm.xlu0 %391, %v333
        %v393 = vpop.permute.xlu0 %392
        %v394 = vlaneseq
        %v395 = vshrl.u32 %v394, 7
        %v396 = vadd.s32 %v395, 80
        %397 = vset.pattern.permute.xlu0 %v396
        %398 = vperm.xlu0 %397, %v333
        %v399 = vpop.permute.xlu0 %398
        %v400 = vlaneseq
        %v401 = vshrl.u32 %v400, 7
        %v402 = vadd.s32 %v401, 88
        %403 = vset.pattern.permute.xlu0 %v402
        %404 = vperm.xlu0 %403, %v333
        %v405 = vpop.permute.xlu0 %404
        %v406 = vlaneseq
        %v407 = vshrl.u32 %v406, 7
        %v408 = vadd.s32 %v407, 96
        %409 = vset.pattern.permute.xlu0 %v408
        %410 = vperm.xlu0 %409, %v333
        %v411 = vpop.permute.xlu0 %410
        %v412 = vlaneseq
        %v413 = vshrl.u32 %v412, 7
        %v414 = vadd.s32 %v413, 104
        %415 = vset.pattern.permute.xlu0 %v414
        %416 = vperm.xlu0 %415, %v333
        %v417 = vpop.permute.xlu0 %416
        %v418 = vlaneseq
        %v419 = vshrl.u32 %v418, 7
        %v420 = vadd.s32 %v419, 112
        %421 = vset.pattern.permute.xlu0 %v420
        %422 = vperm.xlu0 %421, %v333
        %v423 = vpop.permute.xlu0 %422
        %v424 = vlaneseq
        %v425 = vshrl.u32 %v424, 7
        %v426 = vadd.s32 %v425, 120
        %427 = vset.pattern.permute.xlu0 %v426
        %428 = vperm.xlu0 %427, %v333
        %v429 = vpop.permute.xlu0 %428
        %v430 = vperm.slane %v233, 2
        %v431 = vlaneseq
        %v432 = vshrl.u32 %v431, 7
        %434 = vset.pattern.permute.xlu0 %v432
        %435 = vperm.xlu0 %434, %v430
        %v436 = vpop.permute.xlu0 %435
        %v437 = vlaneseq
        %v438 = vshrl.u32 %v437, 7
        %v439 = vadd.s32 %v438, 8
        %440 = vset.pattern.permute.xlu0 %v439
        %441 = vperm.xlu0 %440, %v430
        %v442 = vpop.permute.xlu0 %441
        %v443 = vlaneseq
        %v444 = vshrl.u32 %v443, 7
        %v445 = vadd.s32 %v444, 16
        %446 = vset.pattern.permute.xlu0 %v445
        %447 = vperm.xlu0 %446, %v430
        %v448 = vpop.permute.xlu0 %447
        %v449 = vlaneseq
        %v450 = vshrl.u32 %v449, 7
        %v451 = vadd.s32 %v450, 24
        %452 = vset.pattern.permute.xlu0 %v451
        %453 = vperm.xlu0 %452, %v430
        %v454 = vpop.permute.xlu0 %453
        %v455 = vlaneseq
        %v456 = vshrl.u32 %v455, 7
        %v457 = vadd.s32 %v456, 32
        %458 = vset.pattern.permute.xlu0 %v457
        %459 = vperm.xlu0 %458, %v430
        %v460 = vpop.permute.xlu0 %459
        %v461 = vlaneseq
        %v462 = vshrl.u32 %v461, 7
        %v463 = vadd.s32 %v462, 40
        %464 = vset.pattern.permute.xlu0 %v463
        %465 = vperm.xlu0 %464, %v430
        %v466 = vpop.permute.xlu0 %465
        %v467 = vlaneseq
        %v468 = vshrl.u32 %v467, 7
        %v469 = vadd.s32 %v468, 48
        %470 = vset.pattern.permute.xlu0 %v469
        %471 = vperm.xlu0 %470, %v430
        %v472 = vpop.permute.xlu0 %471
        %v473 = vlaneseq
        %v474 = vshrl.u32 %v473, 7
        %v475 = vadd.s32 %v474, 56
        %476 = vset.pattern.permute.xlu0 %v475
        %477 = vperm.xlu0 %476, %v430
        %v478 = vpop.permute.xlu0 %477
        %v479 = vlaneseq
        %v480 = vshrl.u32 %v479, 7
        %v481 = vadd.s32 %v480, 64
        %482 = vset.pattern.permute.xlu0 %v481
        %483 = vperm.xlu0 %482, %v430
        %v484 = vpop.permute.xlu0 %483
        %v485 = vlaneseq
        %v486 = vshrl.u32 %v485, 7
        %v487 = vadd.s32 %v486, 72
        %488 = vset.pattern.permute.xlu0 %v487
        %489 = vperm.xlu0 %488, %v430
        %v490 = vpop.permute.xlu0 %489
        %v491 = vlaneseq
        %v492 = vshrl.u32 %v491, 7
        %v493 = vadd.s32 %v492, 80
        %494 = vset.pattern.permute.xlu0 %v493
        %495 = vperm.xlu0 %494, %v430
        %v496 = vpop.permute.xlu0 %495
        %v497 = vlaneseq
        %v498 = vshrl.u32 %v497, 7
        %v499 = vadd.s32 %v498, 88
        %500 = vset.pattern.permute.xlu0 %v499
        %501 = vperm.xlu0 %500, %v430
        %v502 = vpop.permute.xlu0 %501
        %v503 = vlaneseq
        %v504 = vshrl.u32 %v503, 7
        %v505 = vadd.s32 %v504, 96
        %506 = vset.pattern.permute.xlu0 %v505
        %507 = vperm.xlu0 %506, %v430
        %v508 = vpop.permute.xlu0 %507
        %v509 = vlaneseq
        %v510 = vshrl.u32 %v509, 7
        %v511 = vadd.s32 %v510, 104
        %512 = vset.pattern.permute.xlu0 %v511
        %513 = vperm.xlu0 %512, %v430
        %v514 = vpop.permute.xlu0 %513
        %v515 = vlaneseq
        %v516 = vshrl.u32 %v515, 7
        %v517 = vadd.s32 %v516, 112
        %518 = vset.pattern.permute.xlu0 %v517
        %519 = vperm.xlu0 %518, %v430
        %v520 = vpop.permute.xlu0 %519
        %v521 = vlaneseq
        %v522 = vshrl.u32 %v521, 7
        %v523 = vadd.s32 %v522, 120
        %524 = vset.pattern.permute.xlu0 %v523
        %525 = vperm.xlu0 %524, %v430
        %v526 = vpop.permute.xlu0 %525
        %v527 = vperm.slane %v233, 3
        %v528 = vlaneseq
        %v529 = vshrl.u32 %v528, 7
        %531 = vset.pattern.permute.xlu0 %v529
        %532 = vperm.xlu0 %531, %v527
        %v533 = vpop.permute.xlu0 %532
        %v534 = vlaneseq
        %v535 = vshrl.u32 %v534, 7
        %v536 = vadd.s32 %v535, 8
        %537 = vset.pattern.permute.xlu0 %v536
        %538 = vperm.xlu0 %537, %v527
        %v539 = vpop.permute.xlu0 %538
        %v540 = vlaneseq
        %v541 = vshrl.u32 %v540, 7
        %v542 = vadd.s32 %v541, 16
        %543 = vset.pattern.permute.xlu0 %v542
        %544 = vperm.xlu0 %543, %v527
        %v545 = vpop.permute.xlu0 %544
        %v546 = vlaneseq
        %v547 = vshrl.u32 %v546, 7
        %v548 = vadd.s32 %v547, 24
        %549 = vset.pattern.permute.xlu0 %v548
        %550 = vperm.xlu0 %549, %v527
        %v551 = vpop.permute.xlu0 %550
        %v552 = vlaneseq
        %v553 = vshrl.u32 %v552, 7
        %v554 = vadd.s32 %v553, 32
        %555 = vset.pattern.permute.xlu0 %v554
        %556 = vperm.xlu0 %555, %v527
        %v557 = vpop.permute.xlu0 %556
        %v558 = vlaneseq
        %v559 = vshrl.u32 %v558, 7
        %v560 = vadd.s32 %v559, 40
        %561 = vset.pattern.permute.xlu0 %v560
        %562 = vperm.xlu0 %561, %v527
        %v563 = vpop.permute.xlu0 %562
        %v564 = vlaneseq
        %v565 = vshrl.u32 %v564, 7
        %v566 = vadd.s32 %v565, 48
        %567 = vset.pattern.permute.xlu0 %v566
        %568 = vperm.xlu0 %567, %v527
        %v569 = vpop.permute.xlu0 %568
        %v570 = vlaneseq
        %v571 = vshrl.u32 %v570, 7
        %v572 = vadd.s32 %v571, 56
        %573 = vset.pattern.permute.xlu0 %v572
        %574 = vperm.xlu0 %573, %v527
        %v575 = vpop.permute.xlu0 %574
        %v576 = vlaneseq
        %v577 = vshrl.u32 %v576, 7
        %v578 = vadd.s32 %v577, 64
        %579 = vset.pattern.permute.xlu0 %v578
        %580 = vperm.xlu0 %579, %v527
        %v581 = vpop.permute.xlu0 %580
        %v582 = vlaneseq
        %v583 = vshrl.u32 %v582, 7
        %v584 = vadd.s32 %v583, 72
        %585 = vset.pattern.permute.xlu0 %v584
        %586 = vperm.xlu0 %585, %v527
        %v587 = vpop.permute.xlu0 %586
        %v588 = vlaneseq
        %v589 = vshrl.u32 %v588, 7
        %v590 = vadd.s32 %v589, 80
        %591 = vset.pattern.permute.xlu0 %v590
        %592 = vperm.xlu0 %591, %v527
        %v593 = vpop.permute.xlu0 %592
        %v594 = vlaneseq
        %v595 = vshrl.u32 %v594, 7
        %v596 = vadd.s32 %v595, 88
        %597 = vset.pattern.permute.xlu0 %v596
        %598 = vperm.xlu0 %597, %v527
        %v599 = vpop.permute.xlu0 %598
        %v600 = vlaneseq
        %v601 = vshrl.u32 %v600, 7
        %v602 = vadd.s32 %v601, 96
        %603 = vset.pattern.permute.xlu0 %v602
        %604 = vperm.xlu0 %603, %v527
        %v605 = vpop.permute.xlu0 %604
        %v606 = vlaneseq
        %v607 = vshrl.u32 %v606, 7
        %v608 = vadd.s32 %v607, 104
        %609 = vset.pattern.permute.xlu0 %v608
        %610 = vperm.xlu0 %609, %v527
        %v611 = vpop.permute.xlu0 %610
        %v612 = vlaneseq
        %v613 = vshrl.u32 %v612, 7
        %v614 = vadd.s32 %v613, 112
        %615 = vset.pattern.permute.xlu0 %v614
        %616 = vperm.xlu0 %615, %v527
        %v617 = vpop.permute.xlu0 %616
        %v618 = vlaneseq
        %v619 = vshrl.u32 %v618, 7
        %v620 = vadd.s32 %v619, 120
        %621 = vset.pattern.permute.xlu0 %v620
        %622 = vperm.xlu0 %621, %v527
        %v623 = vpop.permute.xlu0 %622
        %v624 = vperm.slane %v233, 4
        %v625 = vlaneseq
        %v626 = vshrl.u32 %v625, 7
        %628 = vset.pattern.permute.xlu0 %v626
        %629 = vperm.xlu0 %628, %v624
        %v630 = vpop.permute.xlu0 %629
        %v631 = vlaneseq
        %v632 = vshrl.u32 %v631, 7
        %v633 = vadd.s32 %v632, 8
        %634 = vset.pattern.permute.xlu0 %v633
        %635 = vperm.xlu0 %634, %v624
        %v636 = vpop.permute.xlu0 %635
        %v637 = vlaneseq
        %v638 = vshrl.u32 %v637, 7
        %v639 = vadd.s32 %v638, 16
        %640 = vset.pattern.permute.xlu0 %v639
        %641 = vperm.xlu0 %640, %v624
        %v642 = vpop.permute.xlu0 %641
        %v643 = vlaneseq
        %v644 = vshrl.u32 %v643, 7
        %v645 = vadd.s32 %v644, 24
        %646 = vset.pattern.permute.xlu0 %v645
        %647 = vperm.xlu0 %646, %v624
        %v648 = vpop.permute.xlu0 %647
        %v649 = vlaneseq
        %v650 = vshrl.u32 %v649, 7
        %v651 = vadd.s32 %v650, 32
        %652 = vset.pattern.permute.xlu0 %v651
        %653 = vperm.xlu0 %652, %v624
        %v654 = vpop.permute.xlu0 %653
        %v655 = vlaneseq
        %v656 = vshrl.u32 %v655, 7
        %v657 = vadd.s32 %v656, 40
        %658 = vset.pattern.permute.xlu0 %v657
        %659 = vperm.xlu0 %658, %v624
        %v660 = vpop.permute.xlu0 %659
        %v661 = vlaneseq
        %v662 = vshrl.u32 %v661, 7
        %v663 = vadd.s32 %v662, 48
        %664 = vset.pattern.permute.xlu0 %v663
        %665 = vperm.xlu0 %664, %v624
        %v666 = vpop.permute.xlu0 %665
        %v667 = vlaneseq
        %v668 = vshrl.u32 %v667, 7
        %v669 = vadd.s32 %v668, 56
        %670 = vset.pattern.permute.xlu0 %v669
        %671 = vperm.xlu0 %670, %v624
        %v672 = vpop.permute.xlu0 %671
        %v673 = vlaneseq
        %v674 = vshrl.u32 %v673, 7
        %v675 = vadd.s32 %v674, 64
        %676 = vset.pattern.permute.xlu0 %v675
        %677 = vperm.xlu0 %676, %v624
        %v678 = vpop.permute.xlu0 %677
        %v679 = vlaneseq
        %v680 = vshrl.u32 %v679, 7
        %v681 = vadd.s32 %v680, 72
        %682 = vset.pattern.permute.xlu0 %v681
        %683 = vperm.xlu0 %682, %v624
        %v684 = vpop.permute.xlu0 %683
        %v685 = vlaneseq
        %v686 = vshrl.u32 %v685, 7
        %v687 = vadd.s32 %v686, 80
        %688 = vset.pattern.permute.xlu0 %v687
        %689 = vperm.xlu0 %688, %v624
        %v690 = vpop.permute.xlu0 %689
        %v691 = vlaneseq
        %v692 = vshrl.u32 %v691, 7
        %v693 = vadd.s32 %v692, 88
        %694 = vset.pattern.permute.xlu0 %v693
        %695 = vperm.xlu0 %694, %v624
        %v696 = vpop.permute.xlu0 %695
        %v697 = vlaneseq
        %v698 = vshrl.u32 %v697, 7
        %v699 = vadd.s32 %v698, 96
        %700 = vset.pattern.permute.xlu0 %v699
        %701 = vperm.xlu0 %700, %v624
        %v702 = vpop.permute.xlu0 %701
        %v703 = vlaneseq
        %v704 = vshrl.u32 %v703, 7
        %v705 = vadd.s32 %v704, 104
        %706 = vset.pattern.permute.xlu0 %v705
        %707 = vperm.xlu0 %706, %v624
        %v708 = vpop.permute.xlu0 %707
        %v709 = vlaneseq
        %v710 = vshrl.u32 %v709, 7
        %v711 = vadd.s32 %v710, 112
        %712 = vset.pattern.permute.xlu0 %v711
        %713 = vperm.xlu0 %712, %v624
        %v714 = vpop.permute.xlu0 %713
        %v715 = vlaneseq
        %v716 = vshrl.u32 %v715, 7
        %v717 = vadd.s32 %v716, 120
        %718 = vset.pattern.permute.xlu0 %v717
        %719 = vperm.xlu0 %718, %v624
        %v720 = vpop.permute.xlu0 %719
        %v721 = vperm.slane %v233, 5
        %v722 = vlaneseq
        %v723 = vshrl.u32 %v722, 7
        %725 = vset.pattern.permute.xlu0 %v723
        %726 = vperm.xlu0 %725, %v721
        %v727 = vpop.permute.xlu0 %726
        %v728 = vlaneseq
        %v729 = vshrl.u32 %v728, 7
        %v730 = vadd.s32 %v729, 8
        %731 = vset.pattern.permute.xlu0 %v730
        %732 = vperm.xlu0 %731, %v721
        %v733 = vpop.permute.xlu0 %732
        %v734 = vlaneseq
        %v735 = vshrl.u32 %v734, 7
        %v736 = vadd.s32 %v735, 16
        %737 = vset.pattern.permute.xlu0 %v736
        %738 = vperm.xlu0 %737, %v721
        %v739 = vpop.permute.xlu0 %738
        %v740 = vlaneseq
        %v741 = vshrl.u32 %v740, 7
        %v742 = vadd.s32 %v741, 24
        %743 = vset.pattern.permute.xlu0 %v742
        %744 = vperm.xlu0 %743, %v721
        %v745 = vpop.permute.xlu0 %744
        %v746 = vlaneseq
        %v747 = vshrl.u32 %v746, 7
        %v748 = vadd.s32 %v747, 32
        %749 = vset.pattern.permute.xlu0 %v748
        %750 = vperm.xlu0 %749, %v721
        %v751 = vpop.permute.xlu0 %750
        %v752 = vlaneseq
        %v753 = vshrl.u32 %v752, 7
        %v754 = vadd.s32 %v753, 40
        %755 = vset.pattern.permute.xlu0 %v754
        %756 = vperm.xlu0 %755, %v721
        %v757 = vpop.permute.xlu0 %756
        %v758 = vlaneseq
        %v759 = vshrl.u32 %v758, 7
        %v760 = vadd.s32 %v759, 48
        %761 = vset.pattern.permute.xlu0 %v760
        %762 = vperm.xlu0 %761, %v721
        %v763 = vpop.permute.xlu0 %762
        %v764 = vlaneseq
        %v765 = vshrl.u32 %v764, 7
        %v766 = vadd.s32 %v765, 56
        %767 = vset.pattern.permute.xlu0 %v766
        %768 = vperm.xlu0 %767, %v721
        %v769 = vpop.permute.xlu0 %768
        %v770 = vlaneseq
        %v771 = vshrl.u32 %v770, 7
        %v772 = vadd.s32 %v771, 64
        %773 = vset.pattern.permute.xlu0 %v772
        %774 = vperm.xlu0 %773, %v721
        %v775 = vpop.permute.xlu0 %774
        %v776 = vlaneseq
        %v777 = vshrl.u32 %v776, 7
        %v778 = vadd.s32 %v777, 72
        %779 = vset.pattern.permute.xlu0 %v778
        %780 = vperm.xlu0 %779, %v721
        %v781 = vpop.permute.xlu0 %780
        %v782 = vlaneseq
        %v783 = vshrl.u32 %v782, 7
        %v784 = vadd.s32 %v783, 80
        %785 = vset.pattern.permute.xlu0 %v784
        %786 = vperm.xlu0 %785, %v721
        %v787 = vpop.permute.xlu0 %786
        %v788 = vlaneseq
        %v789 = vshrl.u32 %v788, 7
        %v790 = vadd.s32 %v789, 88
        %791 = vset.pattern.permute.xlu0 %v790
        %792 = vperm.xlu0 %791, %v721
        %v793 = vpop.permute.xlu0 %792
        %v794 = vlaneseq
        %v795 = vshrl.u32 %v794, 7
        %v796 = vadd.s32 %v795, 96
        %797 = vset.pattern.permute.xlu0 %v796
        %798 = vperm.xlu0 %797, %v721
        %v799 = vpop.permute.xlu0 %798
        %v800 = vlaneseq
        %v801 = vshrl.u32 %v800, 7
        %v802 = vadd.s32 %v801, 104
        %803 = vset.pattern.permute.xlu0 %v802
        %804 = vperm.xlu0 %803, %v721
        %v805 = vpop.permute.xlu0 %804
        %v806 = vlaneseq
        %v807 = vshrl.u32 %v806, 7
        %v808 = vadd.s32 %v807, 112
        %809 = vset.pattern.permute.xlu0 %v808
        %810 = vperm.xlu0 %809, %v721
        %v811 = vpop.permute.xlu0 %810
        %v812 = vlaneseq
        %v813 = vshrl.u32 %v812, 7
        %v814 = vadd.s32 %v813, 120
        %815 = vset.pattern.permute.xlu0 %v814
        %816 = vperm.xlu0 %815, %v721
        %v817 = vpop.permute.xlu0 %816
        %v818 = vperm.slane %v233, 6
        %v819 = vlaneseq
        %v820 = vshrl.u32 %v819, 7
        %822 = vset.pattern.permute.xlu0 %v820
        %823 = vperm.xlu0 %822, %v818
        %v824 = vpop.permute.xlu0 %823
        %v825 = vlaneseq
        %v826 = vshrl.u32 %v825, 7
        %v827 = vadd.s32 %v826, 8
        %828 = vset.pattern.permute.xlu0 %v827
        %829 = vperm.xlu0 %828, %v818
        %v830 = vpop.permute.xlu0 %829
        %v831 = vlaneseq
        %v832 = vshrl.u32 %v831, 7
        %v833 = vadd.s32 %v832, 16
        %834 = vset.pattern.permute.xlu0 %v833
        %835 = vperm.xlu0 %834, %v818
        %v836 = vpop.permute.xlu0 %835
        %v837 = vlaneseq
        %v838 = vshrl.u32 %v837, 7
        %v839 = vadd.s32 %v838, 24
        %840 = vset.pattern.permute.xlu0 %v839
        %841 = vperm.xlu0 %840, %v818
        %v842 = vpop.permute.xlu0 %841
        %v843 = vlaneseq
        %v844 = vshrl.u32 %v843, 7
        %v845 = vadd.s32 %v844, 32
        %846 = vset.pattern.permute.xlu0 %v845
        %847 = vperm.xlu0 %846, %v818
        %v848 = vpop.permute.xlu0 %847
        %v849 = vlaneseq
        %v850 = vshrl.u32 %v849, 7
        %v851 = vadd.s32 %v850, 40
        %852 = vset.pattern.permute.xlu0 %v851
        %853 = vperm.xlu0 %852, %v818
        %v854 = vpop.permute.xlu0 %853
        %v855 = vlaneseq
        %v856 = vshrl.u32 %v855, 7
        %v857 = vadd.s32 %v856, 48
        %858 = vset.pattern.permute.xlu0 %v857
        %859 = vperm.xlu0 %858, %v818
        %v860 = vpop.permute.xlu0 %859
        %v861 = vlaneseq
        %v862 = vshrl.u32 %v861, 7
        %v863 = vadd.s32 %v862, 56
        %864 = vset.pattern.permute.xlu0 %v863
        %865 = vperm.xlu0 %864, %v818
        %v866 = vpop.permute.xlu0 %865
        %v867 = vlaneseq
        %v868 = vshrl.u32 %v867, 7
        %v869 = vadd.s32 %v868, 64
        %870 = vset.pattern.permute.xlu0 %v869
        %871 = vperm.xlu0 %870, %v818
        %v872 = vpop.permute.xlu0 %871
        %v873 = vlaneseq
        %v874 = vshrl.u32 %v873, 7
        %v875 = vadd.s32 %v874, 72
        %876 = vset.pattern.permute.xlu0 %v875
        %877 = vperm.xlu0 %876, %v818
        %v878 = vpop.permute.xlu0 %877
        %v879 = vlaneseq
        %v880 = vshrl.u32 %v879, 7
        %v881 = vadd.s32 %v880, 80
        %882 = vset.pattern.permute.xlu0 %v881
        %883 = vperm.xlu0 %882, %v818
        %v884 = vpop.permute.xlu0 %883
        %v885 = vlaneseq
        %v886 = vshrl.u32 %v885, 7
        %v887 = vadd.s32 %v886, 88
        %888 = vset.pattern.permute.xlu0 %v887
        %889 = vperm.xlu0 %888, %v818
        %v890 = vpop.permute.xlu0 %889
        %v891 = vlaneseq
        %v892 = vshrl.u32 %v891, 7
        %v893 = vadd.s32 %v892, 96
        %894 = vset.pattern.permute.xlu0 %v893
        %895 = vperm.xlu0 %894, %v818
        %v896 = vpop.permute.xlu0 %895
        %v897 = vlaneseq
        %v898 = vshrl.u32 %v897, 7
        %v899 = vadd.s32 %v898, 104
        %900 = vset.pattern.permute.xlu0 %v899
        %901 = vperm.xlu0 %900, %v818
        %v902 = vpop.permute.xlu0 %901
        %v903 = vlaneseq
        %v904 = vshrl.u32 %v903, 7
        %v905 = vadd.s32 %v904, 112
        %906 = vset.pattern.permute.xlu0 %v905
        %907 = vperm.xlu0 %906, %v818
        %v908 = vpop.permute.xlu0 %907
        %v909 = vlaneseq
        %v910 = vshrl.u32 %v909, 7
        %v911 = vadd.s32 %v910, 120
        %912 = vset.pattern.permute.xlu0 %v911
        %913 = vperm.xlu0 %912, %v818
        %v914 = vpop.permute.xlu0 %913
        %v915 = vperm.slane %v233, 7
        %v916 = vlaneseq
        %v917 = vshrl.u32 %v916, 7
        %919 = vset.pattern.permute.xlu0 %v917
        %920 = vperm.xlu0 %919, %v915
        %v921 = vpop.permute.xlu0 %920
        %v922 = vlaneseq
        %v923 = vshrl.u32 %v922, 7
        %v924 = vadd.s32 %v923, 8
        %925 = vset.pattern.permute.xlu0 %v924
        %926 = vperm.xlu0 %925, %v915
        %v927 = vpop.permute.xlu0 %926
        %v928 = vlaneseq
        %v929 = vshrl.u32 %v928, 7
        %v930 = vadd.s32 %v929, 16
        %931 = vset.pattern.permute.xlu0 %v930
        %932 = vperm.xlu0 %931, %v915
        %v933 = vpop.permute.xlu0 %932
        %v934 = vlaneseq
        %v935 = vshrl.u32 %v934, 7
        %v936 = vadd.s32 %v935, 24
        %937 = vset.pattern.permute.xlu0 %v936
        %938 = vperm.xlu0 %937, %v915
        %v939 = vpop.permute.xlu0 %938
        %v940 = vlaneseq
        %v941 = vshrl.u32 %v940, 7
        %v942 = vadd.s32 %v941, 32
        %943 = vset.pattern.permute.xlu0 %v942
        %944 = vperm.xlu0 %943, %v915
        %v945 = vpop.permute.xlu0 %944
        %v946 = vlaneseq
        %v947 = vshrl.u32 %v946, 7
        %v948 = vadd.s32 %v947, 40
        %949 = vset.pattern.permute.xlu0 %v948
        %950 = vperm.xlu0 %949, %v915
        %v951 = vpop.permute.xlu0 %950
        %v952 = vlaneseq
        %v953 = vshrl.u32 %v952, 7
        %v954 = vadd.s32 %v953, 48
        %955 = vset.pattern.permute.xlu0 %v954
        %956 = vperm.xlu0 %955, %v915
        %v957 = vpop.permute.xlu0 %956
        %v958 = vlaneseq
        %v959 = vshrl.u32 %v958, 7
        %v960 = vadd.s32 %v959, 56
        %961 = vset.pattern.permute.xlu0 %v960
        %962 = vperm.xlu0 %961, %v915
        %v963 = vpop.permute.xlu0 %962
        %v964 = vlaneseq
        %v965 = vshrl.u32 %v964, 7
        %v966 = vadd.s32 %v965, 64
        %967 = vset.pattern.permute.xlu0 %v966
        %968 = vperm.xlu0 %967, %v915
        %v969 = vpop.permute.xlu0 %968
        %v970 = vlaneseq
        %v971 = vshrl.u32 %v970, 7
        %v972 = vadd.s32 %v971, 72
        %973 = vset.pattern.permute.xlu0 %v972
        %974 = vperm.xlu0 %973, %v915
        %v975 = vpop.permute.xlu0 %974
        %v976 = vlaneseq
        %v977 = vshrl.u32 %v976, 7
        %v978 = vadd.s32 %v977, 80
        %979 = vset.pattern.permute.xlu0 %v978
        %980 = vperm.xlu0 %979, %v915
        %v981 = vpop.permute.xlu0 %980
        %v982 = vlaneseq
        %v983 = vshrl.u32 %v982, 7
        %v984 = vadd.s32 %v983, 88
        %985 = vset.pattern.permute.xlu0 %v984
        %986 = vperm.xlu0 %985, %v915
        %v987 = vpop.permute.xlu0 %986
        %v988 = vlaneseq
        %v989 = vshrl.u32 %v988, 7
        %v990 = vadd.s32 %v989, 96
        %991 = vset.pattern.permute.xlu0 %v990
        %992 = vperm.xlu0 %991, %v915
        %v993 = vpop.permute.xlu0 %992
        %v994 = vlaneseq
        %v995 = vshrl.u32 %v994, 7
        %v996 = vadd.s32 %v995, 104
        %997 = vset.pattern.permute.xlu0 %v996
        %998 = vperm.xlu0 %997, %v915
        %v999 = vpop.permute.xlu0 %998
        %v1000 = vlaneseq
        %v1001 = vshrl.u32 %v1000, 7
        %v1002 = vadd.s32 %v1001, 112
        %1003 = vset.pattern.permute.xlu0 %v1002
        %1004 = vperm.xlu0 %1003, %v915
        %v1005 = vpop.permute.xlu0 %1004
        %v1006 = vlaneseq
        %v1007 = vshrl.u32 %v1006, 7
        %v1008 = vadd.s32 %v1007, 120
        %1009 = vset.pattern.permute.xlu0 %v1008
        %1010 = vperm.xlu0 %1009, %v915
        %v1011 = vpop.permute.xlu0 %1010
        %v1013 = vperm.slane %v235, 0
        %v1015 = vmul.f32 %v242, %v1013
        %v1016 = vmul.f32 %v248, %v1013
        %v1017 = vmul.f32 %v254, %v1013
        %v1018 = vmul.f32 %v260, %v1013
        %v1019 = vmul.f32 %v266, %v1013
        %v1020 = vmul.f32 %v272, %v1013
        %v1021 = vmul.f32 %v278, %v1013
        %v1022 = vmul.f32 %v284, %v1013
        %v1023 = vmul.f32 %v290, %v1013
        %v1024 = vmul.f32 %v296, %v1013
        %v1025 = vmul.f32 %v302, %v1013
        %v1026 = vmul.f32 %v308, %v1013
        %v1027 = vmul.f32 %v314, %v1013
        %v1028 = vmul.f32 %v320, %v1013
        %v1029 = vmul.f32 %v326, %v1013
        %v1030 = vmul.f32 %v332, %v1013
        %v1031 = vmul.f32 %v339, %v1013
        %v1032 = vmul.f32 %v345, %v1013
        %v1033 = vmul.f32 %v351, %v1013
        %v1034 = vmul.f32 %v357, %v1013
        %v1035 = vmul.f32 %v363, %v1013
        %v1036 = vmul.f32 %v369, %v1013
        %v1037 = vmul.f32 %v375, %v1013
        %v1038 = vmul.f32 %v381, %v1013
        %v1039 = vmul.f32 %v387, %v1013
        %v1040 = vmul.f32 %v393, %v1013
        %v1041 = vmul.f32 %v399, %v1013
        %v1042 = vmul.f32 %v405, %v1013
        %v1043 = vmul.f32 %v411, %v1013
        %v1044 = vmul.f32 %v417, %v1013
        %v1045 = vmul.f32 %v423, %v1013
        %v1046 = vmul.f32 %v429, %v1013
        %v1047 = vmul.f32 %v436, %v1013
        %v1048 = vmul.f32 %v442, %v1013
        %v1049 = vmul.f32 %v448, %v1013
        %v1050 = vmul.f32 %v454, %v1013
        %v1051 = vmul.f32 %v460, %v1013
        %v1052 = vmul.f32 %v466, %v1013
        %v1053 = vmul.f32 %v472, %v1013
        %v1054 = vmul.f32 %v478, %v1013
        %v1055 = vmul.f32 %v484, %v1013
        %v1056 = vmul.f32 %v490, %v1013
        %v1057 = vmul.f32 %v496, %v1013
        %v1058 = vmul.f32 %v502, %v1013
        %v1059 = vmul.f32 %v508, %v1013
        %v1060 = vmul.f32 %v514, %v1013
        %v1061 = vmul.f32 %v520, %v1013
        %v1062 = vmul.f32 %v526, %v1013
        %v1063 = vmul.f32 %v533, %v1013
        %v1064 = vmul.f32 %v539, %v1013
        %v1065 = vmul.f32 %v545, %v1013
        %v1066 = vmul.f32 %v551, %v1013
        %v1067 = vmul.f32 %v557, %v1013
        %v1068 = vmul.f32 %v563, %v1013
        %v1069 = vmul.f32 %v569, %v1013
        %v1070 = vmul.f32 %v575, %v1013
        %v1071 = vmul.f32 %v581, %v1013
        %v1072 = vmul.f32 %v587, %v1013
        %v1073 = vmul.f32 %v593, %v1013
        %v1074 = vmul.f32 %v599, %v1013
        %v1075 = vmul.f32 %v605, %v1013
        %v1076 = vmul.f32 %v611, %v1013
        %v1077 = vmul.f32 %v617, %v1013
        %v1078 = vmul.f32 %v623, %v1013
        %v1079 = vmul.f32 %v630, %v1013
        %v1080 = vmul.f32 %v636, %v1013
        %v1081 = vmul.f32 %v642, %v1013
        %v1082 = vmul.f32 %v648, %v1013
        %v1083 = vmul.f32 %v654, %v1013
        %v1084 = vmul.f32 %v660, %v1013
        %v1085 = vmul.f32 %v666, %v1013
        %v1086 = vmul.f32 %v672, %v1013
        %v1087 = vmul.f32 %v678, %v1013
        %v1088 = vmul.f32 %v684, %v1013
        %v1089 = vmul.f32 %v690, %v1013
        %v1090 = vmul.f32 %v696, %v1013
        %v1091 = vmul.f32 %v702, %v1013
        %v1092 = vmul.f32 %v708, %v1013
        %v1093 = vmul.f32 %v714, %v1013
        %v1094 = vmul.f32 %v720, %v1013
        %v1095 = vmul.f32 %v727, %v1013
        %v1096 = vmul.f32 %v733, %v1013
        %v1097 = vmul.f32 %v739, %v1013
        %v1098 = vmul.f32 %v745, %v1013
        %v1099 = vmul.f32 %v751, %v1013
        %v1100 = vmul.f32 %v757, %v1013
        %v1101 = vmul.f32 %v763, %v1013
        %v1102 = vmul.f32 %v769, %v1013
        %v1103 = vmul.f32 %v775, %v1013
        %v1104 = vmul.f32 %v781, %v1013
        %v1105 = vmul.f32 %v787, %v1013
        %v1106 = vmul.f32 %v793, %v1013
        %v1107 = vmul.f32 %v799, %v1013
        %v1108 = vmul.f32 %v805, %v1013
        %v1109 = vmul.f32 %v811, %v1013
        %v1110 = vmul.f32 %v817, %v1013
        %v1111 = vmul.f32 %v824, %v1013
        %v1112 = vmul.f32 %v830, %v1013
        %v1113 = vmul.f32 %v836, %v1013
        %v1114 = vmul.f32 %v842, %v1013
        %v1115 = vmul.f32 %v848, %v1013
        %v1116 = vmul.f32 %v854, %v1013
        %v1117 = vmul.f32 %v860, %v1013
        %v1118 = vmul.f32 %v866, %v1013
        %v1119 = vmul.f32 %v872, %v1013
        %v1120 = vmul.f32 %v878, %v1013
        %v1121 = vmul.f32 %v884, %v1013
        %v1122 = vmul.f32 %v890, %v1013
        %v1123 = vmul.f32 %v896, %v1013
        %v1124 = vmul.f32 %v902, %v1013
        %v1125 = vmul.f32 %v908, %v1013
        %v1126 = vmul.f32 %v914, %v1013
        %v1127 = vmul.f32 %v921, %v1013
        %v1128 = vmul.f32 %v927, %v1013
        %v1129 = vmul.f32 %v933, %v1013
        %v1130 = vmul.f32 %v939, %v1013
        %v1131 = vmul.f32 %v945, %v1013
        %v1132 = vmul.f32 %v951, %v1013
        %v1133 = vmul.f32 %v957, %v1013
        %v1134 = vmul.f32 %v963, %v1013
        %v1135 = vmul.f32 %v969, %v1013
        %v1136 = vmul.f32 %v975, %v1013
        %v1137 = vmul.f32 %v981, %v1013
        %v1138 = vmul.f32 %v987, %v1013
        %v1139 = vmul.f32 %v993, %v1013
        %v1140 = vmul.f32 %v999, %v1013
        %v1141 = vmul.f32 %v1005, %v1013
        %v1142 = vmul.f32 %v1011, %v1013
        %1143 = vst [vmem:[%s204] sm:$0xff] %v1015
        %1144 = vst [vmem:[%s204 + $0x8] sm:$0xff] %v1016
        %1145 = vst [vmem:[%s204 + $0x10] sm:$0xff] %v1017
        %1146 = vst [vmem:[%s204 + $0x18] sm:$0xff] %v1018
        %1147 = vst [vmem:[%s204 + $0x20] sm:$0xff] %v1019
        %1148 = vst [vmem:[%s204 + $0x28] sm:$0xff] %v1020
        %1149 = vst [vmem:[%s204 + $0x30] sm:$0xff] %v1021
        %1150 = vst [vmem:[%s204 + $0x38] sm:$0xff] %v1022
        %1151 = vst [vmem:[%s204 + $0x40] sm:$0xff] %v1023
        %1152 = vst [vmem:[%s204 + $0x48] sm:$0xff] %v1024
        %1153 = vst [vmem:[%s204 + $0x50] sm:$0xff] %v1025
        %1154 = vst [vmem:[%s204 + $0x58] sm:$0xff] %v1026
        %1155 = vst [vmem:[%s204 + $0x60] sm:$0xff] %v1027
        %1156 = vst [vmem:[%s204 + $0x68] sm:$0xff] %v1028
        %1157 = vst [vmem:[%s204 + $0x70] sm:$0xff] %v1029
        %1158 = vst [vmem:[%s204 + $0x78] sm:$0xff] %v1030
        %1159 = vst [vmem:[%s204 + $0x80] sm:$0xff] %v1031
        %1160 = vst [vmem:[%s204 + $0x88] sm:$0xff] %v1032
        %1161 = vst [vmem:[%s204 + $0x90] sm:$0xff] %v1033
        %1162 = vst [vmem:[%s204 + $0x98] sm:$0xff] %v1034
        %1163 = vst [vmem:[%s204 + $0xa0] sm:$0xff] %v1035
        %1164 = vst [vmem:[%s204 + $0xa8] sm:$0xff] %v1036
        %1165 = vst [vmem:[%s204 + $0xb0] sm:$0xff] %v1037
        %1166 = vst [vmem:[%s204 + $0xb8] sm:$0xff] %v1038
        %1167 = vst [vmem:[%s204 + $0xc0] sm:$0xff] %v1039
        %1168 = vst [vmem:[%s204 + $0xc8] sm:$0xff] %v1040
        %1169 = vst [vmem:[%s204 + $0xd0] sm:$0xff] %v1041
        %1170 = vst [vmem:[%s204 + $0xd8] sm:$0xff] %v1042
        %1171 = vst [vmem:[%s204 + $0xe0] sm:$0xff] %v1043
        %1172 = vst [vmem:[%s204 + $0xe8] sm:$0xff] %v1044
        %1173 = vst [vmem:[%s204 + $0xf0] sm:$0xff] %v1045
        %1174 = vst [vmem:[%s204 + $0xf8] sm:$0xff] %v1046
        %1175 = vst [vmem:[%s204 + $0x100] sm:$0xff] %v1047
        %1176 = vst [vmem:[%s204 + $0x108] sm:$0xff] %v1048
        %1177 = vst [vmem:[%s204 + $0x110] sm:$0xff] %v1049
        %1178 = vst [vmem:[%s204 + $0x118] sm:$0xff] %v1050
        %1179 = vst [vmem:[%s204 + $0x120] sm:$0xff] %v1051
        %1180 = vst [vmem:[%s204 + $0x128] sm:$0xff] %v1052
        %1181 = vst [vmem:[%s204 + $0x130] sm:$0xff] %v1053
        %1182 = vst [vmem:[%s204 + $0x138] sm:$0xff] %v1054
        %1183 = vst [vmem:[%s204 + $0x140] sm:$0xff] %v1055
        %1184 = vst [vmem:[%s204 + $0x148] sm:$0xff] %v1056
        %1185 = vst [vmem:[%s204 + $0x150] sm:$0xff] %v1057
        %1186 = vst [vmem:[%s204 + $0x158] sm:$0xff] %v1058
        %1187 = vst [vmem:[%s204 + $0x160] sm:$0xff] %v1059
        %1188 = vst [vmem:[%s204 + $0x168] sm:$0xff] %v1060
        %1189 = vst [vmem:[%s204 + $0x170] sm:$0xff] %v1061
        %1190 = vst [vmem:[%s204 + $0x178] sm:$0xff] %v1062
        %1191 = vst [vmem:[%s204 + $0x180] sm:$0xff] %v1063
        %1192 = vst [vmem:[%s204 + $0x188] sm:$0xff] %v1064
        %1193 = vst [vmem:[%s204 + $0x190] sm:$0xff] %v1065
        %1194 = vst [vmem:[%s204 + $0x198] sm:$0xff] %v1066
        %1195 = vst [vmem:[%s204 + $0x1a0] sm:$0xff] %v1067
        %1196 = vst [vmem:[%s204 + $0x1a8] sm:$0xff] %v1068
        %1197 = vst [vmem:[%s204 + $0x1b0] sm:$0xff] %v1069
        %1198 = vst [vmem:[%s204 + $0x1b8] sm:$0xff] %v1070
        %1199 = vst [vmem:[%s204 + $0x1c0] sm:$0xff] %v1071
        %1200 = vst [vmem:[%s204 + $0x1c8] sm:$0xff] %v1072
        %1201 = vst [vmem:[%s204 + $0x1d0] sm:$0xff] %v1073
        %1202 = vst [vmem:[%s204 + $0x1d8] sm:$0xff] %v1074
        %1203 = vst [vmem:[%s204 + $0x1e0] sm:$0xff] %v1075
        %1204 = vst [vmem:[%s204 + $0x1e8] sm:$0xff] %v1076
        %1205 = vst [vmem:[%s204 + $0x1f0] sm:$0xff] %v1077
        %1206 = vst [vmem:[%s204 + $0x1f8] sm:$0xff] %v1078
        %1207 = vst [vmem:[%s204 + $0x200] sm:$0xff] %v1079
        %1208 = vst [vmem:[%s204 + $0x208] sm:$0xff] %v1080
        %1209 = vst [vmem:[%s204 + $0x210] sm:$0xff] %v1081
        %1210 = vst [vmem:[%s204 + $0x218] sm:$0xff] %v1082
        %1211 = vst [vmem:[%s204 + $0x220] sm:$0xff] %v1083
        %1212 = vst [vmem:[%s204 + $0x228] sm:$0xff] %v1084
        %1213 = vst [vmem:[%s204 + $0x230] sm:$0xff] %v1085
        %1214 = vst [vmem:[%s204 + $0x238] sm:$0xff] %v1086
        %1215 = vst [vmem:[%s204 + $0x240] sm:$0xff] %v1087
        %1216 = vst [vmem:[%s204 + $0x248] sm:$0xff] %v1088
        %1217 = vst [vmem:[%s204 + $0x250] sm:$0xff] %v1089
        %1218 = vst [vmem:[%s204 + $0x258] sm:$0xff] %v1090
        %1219 = vst [vmem:[%s204 + $0x260] sm:$0xff] %v1091
        %1220 = vst [vmem:[%s204 + $0x268] sm:$0xff] %v1092
        %1221 = vst [vmem:[%s204 + $0x270] sm:$0xff] %v1093
        %1222 = vst [vmem:[%s204 + $0x278] sm:$0xff] %v1094
        %1223 = vst [vmem:[%s204 + $0x280] sm:$0xff] %v1095
        %1224 = vst [vmem:[%s204 + $0x288] sm:$0xff] %v1096
        %1225 = vst [vmem:[%s204 + $0x290] sm:$0xff] %v1097
        %1226 = vst [vmem:[%s204 + $0x298] sm:$0xff] %v1098
        %1227 = vst [vmem:[%s204 + $0x2a0] sm:$0xff] %v1099
        %1228 = vst [vmem:[%s204 + $0x2a8] sm:$0xff] %v1100
        %1229 = vst [vmem:[%s204 + $0x2b0] sm:$0xff] %v1101
        %1230 = vst [vmem:[%s204 + $0x2b8] sm:$0xff] %v1102
        %1231 = vst [vmem:[%s204 + $0x2c0] sm:$0xff] %v1103
        %1232 = vst [vmem:[%s204 + $0x2c8] sm:$0xff] %v1104
        %1233 = vst [vmem:[%s204 + $0x2d0] sm:$0xff] %v1105
        %1234 = vst [vmem:[%s204 + $0x2d8] sm:$0xff] %v1106
        %1235 = vst [vmem:[%s204 + $0x2e0] sm:$0xff] %v1107
        %1236 = vst [vmem:[%s204 + $0x2e8] sm:$0xff] %v1108
        %1237 = vst [vmem:[%s204 + $0x2f0] sm:$0xff] %v1109
        %1238 = vst [vmem:[%s204 + $0x2f8] sm:$0xff] %v1110
        %1239 = vst [vmem:[%s204 + $0x300] sm:$0xff] %v1111
        %1240 = vst [vmem:[%s204 + $0x308] sm:$0xff] %v1112
        %1241 = vst [vmem:[%s204 + $0x310] sm:$0xff] %v1113
        %1242 = vst [vmem:[%s204 + $0x318] sm:$0xff] %v1114
        %1243 = vst [vmem:[%s204 + $0x320] sm:$0xff] %v1115
        %1244 = vst [vmem:[%s204 + $0x328] sm:$0xff] %v1116
        %1245 = vst [vmem:[%s204 + $0x330] sm:$0xff] %v1117
        %1246 = vst [vmem:[%s204 + $0x338] sm:$0xff] %v1118
        %1247 = vst [vmem:[%s204 + $0x340] sm:$0xff] %v1119
        %1248 = vst [vmem:[%s204 + $0x348] sm:$0xff] %v1120
        %1249 = vst [vmem:[%s204 + $0x350] sm:$0xff] %v1121
        %1250 = vst [vmem:[%s204 + $0x358] sm:$0xff] %v1122
        %1251 = vst [vmem:[%s204 + $0x360] sm:$0xff] %v1123
        %1252 = vst [vmem:[%s204 + $0x368] sm:$0xff] %v1124
        %1253 = vst [vmem:[%s204 + $0x370] sm:$0xff] %v1125
        %1254 = vst [vmem:[%s204 + $0x378] sm:$0xff] %v1126
        %1255 = vst [vmem:[%s204 + $0x380] sm:$0xff] %v1127
        %1256 = vst [vmem:[%s204 + $0x388] sm:$0xff] %v1128
        %1257 = vst [vmem:[%s204 + $0x390] sm:$0xff] %v1129
        %1258 = vst [vmem:[%s204 + $0x398] sm:$0xff] %v1130
        %1259 = vst [vmem:[%s204 + $0x3a0] sm:$0xff] %v1131
        %1260 = vst [vmem:[%s204 + $0x3a8] sm:$0xff] %v1132
        %1261 = vst [vmem:[%s204 + $0x3b0] sm:$0xff] %v1133
        %1262 = vst [vmem:[%s204 + $0x3b8] sm:$0xff] %v1134
        %1263 = vst [vmem:[%s204 + $0x3c0] sm:$0xff] %v1135
        %1264 = vst [vmem:[%s204 + $0x3c8] sm:$0xff] %v1136
        %1265 = vst [vmem:[%s204 + $0x3d0] sm:$0xff] %v1137
        %1266 = vst [vmem:[%s204 + $0x3d8] sm:$0xff] %v1138
        %1267 = vst [vmem:[%s204 + $0x3e0] sm:$0xff] %v1139
        %1268 = vst [vmem:[%s204 + $0x3e8] sm:$0xff] %v1140
        %1269 = vst [vmem:[%s204 + $0x3f0] sm:$0xff] %v1141
        %1270 = vst [vmem:[%s204 + $0x3f8] sm:$0xff] %v1142
        %s1271 = sand.u32 %s97, 1
        %s1272 = scalar_lea.sflag [#allocation4], %s1271
        %s1273 = sand.u32 %s97, 1
        %s1274 = smul.addr %s1273, 1024
        %s1275 = scalar_lea.vmem [#allocation7], %s1274
        // Predicated region
        $region41: #{tpu_custom_call.1} parent=31 // pred_check
          %p1276 = pneg %p107
        $region42: #{tpu_custom_call.1} parent=31 // pred_check_branch
          %1278 = sbr.rel (%p1276) target = $region44
        $region43: #{tpu_custom_call.1} parent=31 // pred_region
          %s1279 = smul.u32 8, %s21
          %1281 = vsyncadd %s1272, 0
          %s1282 = smul.addr %s1279, 16
          %s1283 = smul.addr %s1282, 8
          %s1284 = scalar_lea.hbm %s3, %s1283
          %s1285 = sshll.u32 %s1275, 4
          %s1286 = int_to_ptr.vmem [resolvable:$true] %s1285
          %s1287 = sshll.u32 %s1284, 4
          %s1288 = int_to_ptr.hbm [resolvable:$true] %s1287
          %1293 = dma.vmem_to_hbm [thread:$0]  %s1286, 16384, %s1288, %s1272, 128, 128, 8
        $region44: #{tpu_custom_call.1} parent=31 // pred_fallthru
          _
      $region32: #{tpu_custom_call.1} parent=5 // pred_fallthru
        _
      %p1294 = scmp.le.s32.totalorder 2, %s16
      // Predicated region
      $region45: #{tpu_custom_call.1} parent=5 // pred_check
        %p1295 = pneg %p1294
      $region46: #{tpu_custom_call.1} parent=5 // pred_check_branch
        %1297 = sbr.rel (%p1295) target = $region48
      $region47: #{tpu_custom_call.1} parent=5 // pred_region
        %s1298 = ssub.s32 %s16, 2
        // Predicated region
        $region49: #{tpu_custom_call.1} parent=47 // pred_check
          %p1299 = pneg %p113
        $region50: #{tpu_custom_call.1} parent=47 // pred_check_branch
          %1301 = sbr.rel (%p1299) target = $region52
        $region51: #{tpu_custom_call.1} parent=47 // pred_region
          %s1302 = sand.u32 %s98, 1
          %s1303 = scalar_lea.sflag [#allocation4], %s1302
          %s1304 = sand.u32 %s98, 1
          %s1305 = smul.addr %s1304, 1024
          %s1306 = scalar_lea.vmem [#allocation7], %s1305
          %1308 = dma.done %s1303, 16384
        $region52: #{tpu_custom_call.1} parent=47 // pred_fallthru
          _
      $region48: #{tpu_custom_call.1} parent=5 // pred_fallthru
        _
    $region6: #{tpu_custom_call.1} parent=1 // loop_footer
      %s20 = sadd.s32 1, %s16
    $region7: #{tpu_custom_call.1} parent=1 // loop_footer_branch
      %15 = sbr.rel target = $region3
    $region8: #{tpu_custom_call.1} parent=1 // loop_exit
      _
    %1309 = vsyncpa [#allocation3], 1
    %s1310 = scalar_lea.sflag [#allocation3], 1
    %1311 = vsyncpa %s1310, 1
    %1312 = vsyncpa [#allocation6], 1
    %1313 = vsyncpa [#allocation4], 1
    %s1314 = scalar_lea.sflag [#allocation4], 1
    %1315 = vsyncpa %s1314, 1

</llo_original>
